<compile_context>
chip_gen: v7x
topology: tpu7x:2x2x1
jax: 0.10.0
libtpu: 0.0.40
codegen_flags: <defaults>
</compile_context>

<pallas_src>
import jax
import jax.numpy as jnp
from jax.experimental import pallas as pl
from jax.experimental.pallas import tpu as pltpu


def masked_mean_pool_kernel(tok_ref, mask_ref, out_ref, acc_ref, msum_ref):
    # Per-grid-step block shapes:
    #   tok_ref : (tb, st, th)  token embeddings (native dtype, e.g. bf16/f32)
    #   mask_ref: (tb, st, 1)   attention mask (S on sublanes, like tok_ref)
    #   out_ref : (tb, th)      pooled sentence embeddings (f32)
    #   acc_ref : (tb, th) f32  running sum of masked embeddings
    #   msum_ref: (tb, 1)  f32  running sum of the mask
    s = pl.program_id(2)

    @pl.when(s == 0)
    def _():
        acc_ref[...] = jnp.zeros_like(acc_ref)
        msum_ref[...] = jnp.zeros_like(msum_ref)

    tok = tok_ref[...]                               # native dtype
    m = mask_ref[...]                                # (tb, st, 1)
    masked = tok * m.astype(tok.dtype)               # {0,1} exact; lane-bcast over H
    acc_ref[...] += jnp.sum(masked, axis=1, dtype=jnp.float32)       # (tb, th)
    msum_ref[...] += jnp.sum(m.astype(jnp.float32), axis=1)          # (tb, 1)

    @pl.when(s == pl.num_programs(2) - 1)
    def _():
        # Clamp like sentence-transformers' pooling; all-padding rows stay finite.
        inv = pl.reciprocal(jnp.maximum(msum_ref[...], 1e-9), approx=True)
        out_ref[...] = (acc_ref[...] * inv).astype(out_ref.dtype)


def _choose_tiles(B, S, H, itemsize, budget_bytes=2 * 1024 * 1024):
    """Pick (tb, st, th) tiles.

    Constraints honoured:
      * out block (tb, th): tb % 8 == 0 or tb == B; th % 128 == 0 or th == H.
      * token block (tb, st, th): st % 8 == 0 or st == S.
      * st divides S exactly, so no padded garbage is folded into the
        accumulator along the reduction axis.
    ~2 MiB per token buffer is past the HBM-roofline knee; bigger tiles only
    burn VMEM headroom (double-buffered).
    """
    tb = 8 if B >= 8 else B

    # Split H (in 128-lane multiples) only when the batch axis alone cannot
    # give >=2 parallel grid steps — keeps both v7x TensorCores busy.
    th = H
    if pl.cdiv(B, tb) < 2 and H % 128 == 0 and H >= 256:
        n128 = H // 128
        for k in range(2, n128 + 1):
            if n128 % k == 0:            # th = H/k is a 128-multiple dividing H
                th = H // k
                break

    # Sequence tile: largest multiple of 8 dividing S whose slab fits budget.
    st = S
    if S % 8 == 0:
        per_s_row = tb * th * itemsize
        cands = [c for c in range(8, S + 1, 8) if S % c == 0]
        fitting = [c for c in cands if c * per_s_row <= budget_bytes]
        st = max(fitting) if fitting else min(cands)
    return tb, st, th


def sbert_sentence_embedding(token_embeddings, attention_mask):
    """Masked mean pooling matching torch:
       sum(token_embeddings * mask.unsqueeze(-1).float(), 1) / sum(mask, 1)."""
    B, S, H = token_embeddings.shape
    itemsize = jnp.dtype(token_embeddings.dtype).itemsize
    tb, st, th = _choose_tiles(B, S, H, itemsize)
    grid = (pl.cdiv(B, tb), H // th, S // st)

    # Metadata-only reshape: put S on the sublane axis to match the token block.
    mask3 = attention_mask.reshape(B, S, 1)

    return pl.pallas_call(
        masked_mean_pool_kernel,
        out_shape=jax.ShapeDtypeStruct((B, H), jnp.float32),
        grid_spec=pltpu.PrefetchScalarGridSpec(
            num_scalar_prefetch=0,
            grid=grid,
            in_specs=[
                pl.BlockSpec((tb, st, th), lambda b, h, s: (b, s, h)),
                pl.BlockSpec((tb, st, 1), lambda b, h, s: (b, s, 0)),
            ],
            out_specs=pl.BlockSpec((tb, th), lambda b, h, s: (b, h)),
            scratch_shapes=[
                pltpu.VMEM((tb, th), jnp.float32),
                pltpu.VMEM((tb, 1), jnp.float32),
            ],
        ),
        compiler_params=pltpu.CompilerParams(
            dimension_semantics=("parallel", "parallel", "arbitrary"),
        ),
    )(token_embeddings, mask3)


def sbert_forward(features):
    """Mirrors SBERT.forward: consumes bert_features, adds 'sentence_embedding'."""
    # TODO(synk): the wrapped `bert_model` is an external module passed to
    # __init__ (no architecture defined in this file); its outputs are taken
    # directly as the pooling kernel's inputs instead of being recomputed.
    token_embeddings = features["token_embeddings"]   # (B, S, H)
    attention_mask = features["attention_mask"]       # (B, S)
    _cls = features["cls_token_embeddings"]           # read but unused, as in torch

    sentence_embedding = sbert_sentence_embedding(token_embeddings, attention_mask)

    out = dict(features)
    out["sentence_embedding"] = sentence_embedding
    return out


def _reference_pool(token_embeddings, attention_mask):
    m = attention_mask.astype(jnp.float32)[:, :, None]
    tok = token_embeddings.astype(jnp.float32)
    return jnp.sum(tok * m, axis=1) / jnp.maximum(jnp.sum(m, axis=1), 1e-9)


if __name__ == "__main__":
    # --- small deterministic check (shapes implied by the module) -----------
    B, S, H = 2, 8, 32
    key = jax.random.PRNGKey(0)
    k_tok, k_cls = jax.random.split(key)

    token_embeddings = jax.random.normal(k_tok, (B, S, H), dtype=jnp.float32)
    cls_token_embeddings = jax.random.normal(k_cls, (B, H), dtype=jnp.float32)
    # deterministic mask: batch 0 attends to 5 tokens, batch 1 to all 8
    attention_mask = jnp.array(
        [[1, 1, 1, 1, 1, 0, 0, 0],
         [1, 1, 1, 1, 1, 1, 1, 1]], dtype=jnp.int32)

    features = {
        "token_embeddings": token_embeddings,
        "cls_token_embeddings": cls_token_embeddings,
        "attention_mask": attention_mask,
    }

    out = sbert_forward(features)
    sent = jax.block_until_ready(out["sentence_embedding"])
    ref = _reference_pool(token_embeddings, attention_mask)
    assert sent.shape == (B, H)
    # approx reciprocal (EUP) -> tolerance ~1e-3 relative
    assert jnp.allclose(sent, ref, atol=2e-3, rtol=2e-3)

    # --- larger bf16 check: multi-row batch blocks + multi-step S reduction ---
    B2, S2, H2 = 16, 128, 64
    k_tok2, k_len2 = jax.random.split(jax.random.PRNGKey(1))
    tok2 = jax.random.normal(k_tok2, (B2, S2, H2), dtype=jnp.bfloat16)
    lens = jax.random.randint(k_len2, (B2,), 1, S2 + 1)
    mask2 = (jnp.arange(S2)[None, :] < lens[:, None]).astype(jnp.int32)

    got2 = jax.block_until_ready(sbert_sentence_embedding(tok2, mask2))
    ref2 = _reference_pool(tok2, mask2)
    assert got2.shape == (B2, H2)
    assert jnp.allclose(got2, ref2, atol=2e-2, rtol=2e-2)

    print("KERNEL_OK")
</pallas_src>

<mosaic_0001>
module attributes {stable_mosaic.version = 11 : i64} {
  func.func @masked_mean_pool_kernel(%arg0: i32, %arg1: i32, %arg2: i32, %arg3: memref<2x8x32xf32, #tpu.memory_space<vmem>>, %arg4: memref<2x8x1xi32, #tpu.memory_space<vmem>>, %arg5: memref<2x32xf32, #tpu.memory_space<vmem>>, %arg6: memref<2x32xf32, #tpu.memory_space<vmem>>, %arg7: memref<2x1xf32, #tpu.memory_space<vmem>>) attributes {dimension_semantics = [#tpu.dimension_semantics<parallel>, #tpu.dimension_semantics<parallel>, #tpu.dimension_semantics<arbitrary>], iteration_bounds = array<i64: 1, 1, 1>, scalar_prefetch = 0 : i64, scratch_operands = 2 : i64, tpu.core_type = #tpu.core_type<tc>, window_params = [{transform_indices = @transform_0, window_bounds = array<i64: 2, 8, 32>}, {transform_indices = @transform_1, window_bounds = array<i64: 2, 8, 1>}, {transform_indices = @transform_2, window_bounds = array<i64: 2, 32>}]} {
    %c0_i32 = arith.constant 0 : i32
    %0 = arith.cmpi eq, %arg2, %c0_i32 : i32
    %1 = arith.extui %0 : i1 to i32
    %c0_i32_0 = arith.constant 0 : i32
    %2 = arith.cmpi ne, %1, %c0_i32_0 : i32
    scf.if %2 {
      %cst_17 = arith.constant 0.000000e+00 : f32
      %20 = vector.broadcast %cst_17 : f32 to vector<2x32xf32>
      %c0_18 = arith.constant 0 : index
      %c0_19 = arith.constant 0 : index
      %21 = vector.load %arg6[%c0_18, %c0_19] : memref<2x32xf32, #tpu.memory_space<vmem>>, vector<2x32xf32>
      tpu.vector_store %arg6[%c0_18, %c0_19], %20 {strides = array<i32>} : memref<2x32xf32, #tpu.memory_space<vmem>>, vector<2x32xf32>,
      %cst_20 = arith.constant 0.000000e+00 : f32
      %22 = vector.broadcast %cst_20 : f32 to vector<2x1xf32>
      %c0_21 = arith.constant 0 : index
      %c0_22 = arith.constant 0 : index
      %23 = vector.load %arg7[%c0_21, %c0_22] : memref<2x1xf32, #tpu.memory_space<vmem>>, vector<2x1xf32>
      tpu.vector_store %arg7[%c0_21, %c0_22], %22 {strides = array<i32>} : memref<2x1xf32, #tpu.memory_space<vmem>>, vector<2x1xf32>,
    } else {
    }
    %c0 = arith.constant 0 : index
    %c0_1 = arith.constant 0 : index
    %c0_2 = arith.constant 0 : index
    %3 = vector.load %arg3[%c0, %c0_1, %c0_2] : memref<2x8x32xf32, #tpu.memory_space<vmem>>, vector<2x8x32xf32>
    %c0_3 = arith.constant 0 : index
    %c0_4 = arith.constant 0 : index
    %c0_5 = arith.constant 0 : index
    %4 = vector.load %arg4[%c0_3, %c0_4, %c0_5] : memref<2x8x1xi32, #tpu.memory_space<vmem>>, vector<2x8x1xi32>
    %5 = arith.sitofp %4 : vector<2x8x1xi32> to vector<2x8x1xf32>
    %6 = vector.broadcast %5 : vector<2x8x1xf32> to vector<2x8x32xf32>
    %7 = arith.mulf %3, %6 : vector<2x8x32xf32>
    %c0_6 = arith.constant 0 : index
    %c0_7 = arith.constant 0 : index
    %8 = vector.load %arg6[%c0_6, %c0_7] : memref<2x32xf32, #tpu.memory_space<vmem>>, vector<2x32xf32>
    %cst = arith.constant dense<0.000000e+00> : vector<2x32xf32>
    %9 = vector.multi_reduction <add>, %7, %cst [1] : vector<2x8x32xf32> to vector<2x32xf32>
    %10 = arith.addf %8, %9 : vector<2x32xf32>
    %c0_8 = arith.constant 0 : index
    %c0_9 = arith.constant 0 : index
    %11 = vector.load %arg6[%c0_8, %c0_9] : memref<2x32xf32, #tpu.memory_space<vmem>>, vector<2x32xf32>
    tpu.vector_store %arg6[%c0_8, %c0_9], %10 {strides = array<i32>} : memref<2x32xf32, #tpu.memory_space<vmem>>, vector<2x32xf32>,
    %c0_10 = arith.constant 0 : index
    %c0_11 = arith.constant 0 : index
    %12 = vector.load %arg7[%c0_10, %c0_11] : memref<2x1xf32, #tpu.memory_space<vmem>>, vector<2x1xf32>
    %13 = arith.sitofp %4 : vector<2x8x1xi32> to vector<2x8x1xf32>
    %cst_12 = arith.constant dense<0.000000e+00> : vector<2x1xf32>
    %14 = vector.multi_reduction <add>, %13, %cst_12 [1] : vector<2x8x1xf32> to vector<2x1xf32>
    %15 = arith.addf %12, %14 : vector<2x1xf32>
    %c0_13 = arith.constant 0 : index
    %c0_14 = arith.constant 0 : index
    %16 = vector.load %arg7[%c0_13, %c0_14] : memref<2x1xf32, #tpu.memory_space<vmem>>, vector<2x1xf32>
    tpu.vector_store %arg7[%c0_13, %c0_14], %15 {strides = array<i32>} : memref<2x1xf32, #tpu.memory_space<vmem>>, vector<2x1xf32>,
    %c0_i32_15 = arith.constant 0 : i32
    %17 = arith.cmpi eq, %arg2, %c0_i32_15 : i32
    %18 = arith.extui %17 : i1 to i32
    %c0_i32_16 = arith.constant 0 : i32
    %19 = arith.cmpi ne, %18, %c0_i32_16 : i32
    scf.if %19 {
      %c0_17 = arith.constant 0 : index
      %c0_18 = arith.constant 0 : index
      %20 = vector.load %arg7[%c0_17, %c0_18] : memref<2x1xf32, #tpu.memory_space<vmem>>, vector<2x1xf32>
      %cst_19 = arith.constant 9.99999971E-10 : f32
      %21 = vector.broadcast %cst_19 : f32 to vector<2x1xf32>
      %22 = arith.maximumf %20, %21 : vector<2x1xf32>
      %23 = tpu.reciprocal %22 {approx = true} : vector<2x1xf32> -> vector<2x1xf32>
      %c0_20 = arith.constant 0 : index
      %c0_21 = arith.constant 0 : index
      %24 = vector.load %arg6[%c0_20, %c0_21] : memref<2x32xf32, #tpu.memory_space<vmem>>, vector<2x32xf32>
      %25 = vector.broadcast %23 : vector<2x1xf32> to vector<2x32xf32>
      %26 = arith.mulf %24, %25 : vector<2x32xf32>
      %c0_22 = arith.constant 0 : index
      %c0_23 = arith.constant 0 : index
      %27 = vector.load %arg5[%c0_22, %c0_23] : memref<2x32xf32, #tpu.memory_space<vmem>>, vector<2x32xf32>
      tpu.vector_store %arg5[%c0_22, %c0_23], %26 {strides = array<i32>} : memref<2x32xf32, #tpu.memory_space<vmem>>, vector<2x32xf32>,
    } else {
    }
    return
  }
  func.func @transform_0(%arg0: i32, %arg1: i32, %arg2: i32) -> (i32, i32, i32) {
    %c0_i32 = arith.constant 0 : i32
    return %arg0, %arg2, %arg1 : i32, i32, i32
  }
  func.func @transform_1(%arg0: i32, %arg1: i32, %arg2: i32) -> (i32, i32, i32) {
    %c0_i32 = arith.constant 0 : i32
    %c0_i32_0 = arith.constant 0 : i32
    return %arg0, %arg2, %c0_i32 : i32, i32, i32
  }
  func.func @transform_2(%arg0: i32, %arg1: i32, %arg2: i32) -> (i32, i32) {
    %c0_i32 = arith.constant 0 : i32
    return %arg0, %arg1 : i32, i32
  }
}

</mosaic_0001>

<llo_original>
// kernel: tpu_custom_call.1
$region0: #{tpu_custom_call.1}
  #allocation0 [shape = 'u32[]', space=smem, size = 0x4, offset = 0x4, fixed_abs, tag = 'smem constant byte address 0x4 - core index']
  #allocation1 [shape = 'u32[144,128]{1,0:T(1,128)}', space=vmem, size = 0x12000, scoped, tag = 'internal scratch']
  #allocation2 [shape = 'f32[2,32]{1,0:T(2,128)}', space=vmem, size = 0x400, scoped, tag = 'scratch operand']
  #allocation3 [shape = 'f32[2,1]{1,0:T(2,128)}', space=vmem, size = 0x400, scoped, tag = 'scratch operand']
  %s0 = inlined_call_operand.vmem [shape: f32[2,8,32], index: 0, kind: input, shape index: {}]
  %s1 = inlined_call_operand.vmem [shape: s32[2,8,1], index: 1, kind: input, shape index: {}]
  %s2 = inlined_call_operand.hbm [shape: f32[2,32], index: 2, kind: output, shape index: {}]
  %s3 = sld [smem:[#allocation0]]
  $region26: #{tpu_custom_call.1} parent=0
    _
  %s5 = ssub.s32 1, %s3
  %s6 = scalar_select 0, %s5, %s3
  $region1: #{tpu_custom_call.1} parent=0
    #allocation4 [shape = 'u8[1024]{0}', space=vmem, size = 0x400, scoped, tag = 'output window, operand 0, single buffered']
    #allocation5 [shape = 's32[1]{0}', space=sflag, size = 0x4, scoped, tag = 'scoped memory for tpu_custom_call.1']
    %7 = vsyncpa [#allocation5], 0
    // Predicated region
    $region2: #{tpu_custom_call.1} parent=1 // pred_check
      _
    $region3: #{tpu_custom_call.1} parent=1 // pred_check_branch
      %9 = sbr.rel (0) target = $region5
    $region4: #{tpu_custom_call.1} parent=1 // pred_region
      _
    $region5: #{tpu_custom_call.1} parent=1 // pred_fallthru
      _
    // Predicated region
    $region6: #{tpu_custom_call.1} parent=1 // pred_check
      _
    $region7: #{tpu_custom_call.1} parent=1 // pred_check_branch
      %11 = sbr.rel (0) target = $region9
    $region8: #{tpu_custom_call.1} parent=1 // pred_region
      _
    $region9: #{tpu_custom_call.1} parent=1 // pred_fallthru
      _
    %p12 = scmp.eq.s32.totalorder 0, 0
    // Predicated region
    $region10: #{tpu_custom_call.1} parent=1 // pred_check
      %p13 = pneg %p12
    $region11: #{tpu_custom_call.1} parent=1 // pred_check_branch
      %15 = sbr.rel (%p13) target = $region13
    $region12: #{tpu_custom_call.1} parent=1 // pred_region
      %vm16 = vcmask 254976
      %17 = vst.msk [vmem:[#allocation2] sm:$0x3] %vm16, 0.0
      %vm18 = vcmask 1024
      %19 = vst.msk [vmem:[#allocation3] sm:$0x3] %vm18, 0.0
    $region13: #{tpu_custom_call.1} parent=1 // pred_fallthru
      _
    %v20 = vld [vmem:[%s0] sm:$0xff]
    %v21 = vld [vmem:[%s0 + $0x8] sm:$0xff]
    %v22 = vld [vmem:[%s1] sm:$0xff]
    %v23 = vld [vmem:[%s1 + $0x8] sm:$0xff]
    %v24 = vcvt.s32.f32 %v22
    %v25 = vcvt.s32.f32 %v23
    %27 = vset.pattern.permute.xlu0 0
    %28 = vperm.xlu0 %27, %v24
    %v29 = vpop.permute.xlu0 %28
    %32 = vset.pattern.permute.xlu0 0
    %33 = vperm.xlu0 %32, %v25
    %v34 = vpop.permute.xlu0 %33
    %v36 = vmul.f32 %v20, %v29
    %v37 = vmul.f32 %v21, %v34
    %v38 = vld [vmem:[#allocation2] sm:$0x3]
    %vm39 = vcmask 261120
    %v40 = vsel %vm39, %v36, 0.0
    %v41 = vrot.slane %v40, 4
    %v42 = vadd.f32 %v40, %v41
    %v43 = vrot.slane %v42, 2
    %v44 = vadd.f32 %v42, %v43
    %v45 = vrot.slane %v44, 1
    %v46 = vadd.f32 %v44, %v45
    %v47 = vsel %vm39, %v37, 0.0
    %v48 = vrot.slane %v47, 4
    %v49 = vadd.f32 %v47, %v48
    %v50 = vrot.slane %v49, 2
    %v51 = vadd.f32 %v49, %v50
    %v52 = vrot.slane %v51, 1
    %v53 = vadd.f32 %v51, %v52
    %vm56 = vcmask 1041409
    %v57 = vsel %vm56, %v53, %v46
    %v59 = vadd.f32 %v38, %v57
    %vm60 = vcmask 254976
    %61 = vst.msk [vmem:[#allocation2] sm:$0x3] %vm60, %v59
    %v62 = vld [vmem:[#allocation3] sm:$0x3]
    %vm63 = vcmask 7168
    %v64 = vsel %vm63, %v24, 0.0
    %v65 = vrot.slane %v64, 4
    %v66 = vadd.f32 %v64, %v65
    %v67 = vrot.slane %v66, 2
    %v68 = vadd.f32 %v66, %v67
    %v69 = vrot.slane %v68, 1
    %v70 = vadd.f32 %v68, %v69
    %v71 = vsel %vm63, %v25, 0.0
    %v72 = vrot.slane %v71, 4
    %v73 = vadd.f32 %v71, %v72
    %v74 = vrot.slane %v73, 2
    %v75 = vadd.f32 %v73, %v74
    %v76 = vrot.slane %v75, 1
    %v77 = vadd.f32 %v75, %v76
    %v80 = vsel %vm56, %v77, %v70
    %v82 = vadd.f32 %v62, %v80
    %vm83 = vcmask 1024
    %84 = vst.msk [vmem:[#allocation3] sm:$0x3] %vm83, %v82
    // Predicated region
    $region14: #{tpu_custom_call.1} parent=1 // pred_check
      %p85 = pneg %p12
    $region15: #{tpu_custom_call.1} parent=1 // pred_check_branch
      %87 = sbr.rel (%p85) target = $region17
    $region16: #{tpu_custom_call.1} parent=1 // pred_region
      %v88 = vld [vmem:[#allocation3] sm:$0x3]
      %v89 = vmax.f32 %v88, 1e-09
      %v90 = vrcp.pop %v89
      %v91 = vld [vmem:[#allocation2] sm:$0x3]
      %93 = vset.pattern.permute.xlu0 0
      %94 = vperm.xlu0 %93, %v90
      %v95 = vpop.permute.xlu0 %94
      %v97 = vmul.f32 %v91, %v95
      %98 = vst.msk [vmem:[#allocation4] sm:$0x3] %vm60, %v97
    $region17: #{tpu_custom_call.1} parent=1 // pred_fallthru
      _
    // Predicated region
    $region18: #{tpu_custom_call.1} parent=1 // pred_check
      _
    $region19: #{tpu_custom_call.1} parent=1 // pred_check_branch
      %100 = sbr.rel (0) target = $region21
    $region20: #{tpu_custom_call.1} parent=1 // pred_region
      %s102 = ssub.s32 32, 32
      %103 = vsyncadd [#allocation5], %s102
      %s105 = sshll.u32 [#allocation4], 4
      %s106 = int_to_ptr.vmem [resolvable:$true] %s105
      %108 = dma.vmem_to_hbm [thread:$0]  %s106, 32, %s2, [#allocation5]
    $region21: #{tpu_custom_call.1} parent=1 // pred_fallthru
      _
    // Predicated region
    $region22: #{tpu_custom_call.1} parent=1 // pred_check
      _
    $region23: #{tpu_custom_call.1} parent=1 // pred_check_branch
      %110 = sbr.rel (0) target = $region25
    $region24: #{tpu_custom_call.1} parent=1 // pred_region
      %111 = dma.done [#allocation5], 32
    $region25: #{tpu_custom_call.1} parent=1 // pred_fallthru
      _
    %112 = vsyncpa [#allocation5], 1

</llo_original>
